<compile_context>
chip_gen: v7x
topology: tpu7x:2x2x1
jax: 0.10.0
libtpu: 0.0.40
codegen_flags: <defaults>
</compile_context>

<pallas_src>
import functools

import jax
import jax.numpy as jnp
from jax.experimental import pallas as pl
from jax.experimental.pallas import tpu as pltpu


def _layer_norm_kernel(eps, gamma_ref, beta_ref, x_ref, o_ref):
    # x_ref: (C, tt)   gamma_ref/beta_ref: (C, 1)   o_ref: (C, tt)
    x = x_ref[...].astype(jnp.float32)

    # Per-time-step statistics over the channel (sublane) axis -- XLU reduce.
    mean = jnp.mean(x, axis=0, keepdims=True)             # (1, tt)
    d = x - mean
    var = jnp.mean(d * d, axis=0, keepdims=True)          # (1, tt), population var
    inv = jax.lax.rsqrt(var + eps)                        # EUP rsqrt

    g = gamma_ref[...].astype(jnp.float32)                # (C, 1) -> broadcast over time
    b = beta_ref[...].astype(jnp.float32)
    o_ref[...] = (d * inv * g + b).astype(o_ref.dtype)


def _tpu_vmem_capacity_bytes():
    """Per-core VMEM capacity; conservative default if the query is unavailable."""
    try:
        return int(pltpu.get_tpu_info().vmem_capacity_bytes)
    except Exception:
        return 64 * 1024 * 1024  # v7x per-TensorCore size (smallest of the three gens)


def _round_down_128(n):
    return (n // 128) * 128


def _pick_time_tile(B, C, T, itemsize, vmem_capacity_bytes):
    """Byte-targeted, lane-dense (multiple-of-128) time tile.

    Targets ~2 MiB per x block (HBM-roofline sweet spot for mem-bound kernels)
    while keeping the pipelined footprint (2 in + 2 out double buffers) inside
    a generation-aware VMEM budget, and keeping >=2 grid steps for megacore.
    """
    t_pad = -(-T // 128) * 128                       # ceil T to a lane-dense extent
    target_block_bytes = 2 << 20                     # ~2 MiB per block
    budget = min(24 << 20, vmem_capacity_bytes // 2)  # cap pipelined footprint
    max_block_bytes = max(budget // 4, 128 * C * itemsize)
    block_bytes = min(target_block_bytes, max_block_bytes)

    tt = _round_down_128(block_bytes // (C * itemsize))
    tt = max(128, min(tt, t_pad))

    # Keep at least a couple of parallel grid steps (v7x has 2 TensorCores).
    while tt > 128 and B * (-(-T // tt)) < 2:
        tt = max(128, _round_down_128(tt // 2))
    return tt


def pallas_channel_layer_norm(x, gamma, beta, eps=1e-5):
    """LayerNorm over channels of a (B, C, T) tensor (== the PyTorch module)."""
    assert x.ndim == 3, "expected (batch, channels, time_steps)"
    B, C, T = x.shape
    assert gamma.shape == (C,) and beta.shape == (C,)

    itemsize = jnp.dtype(x.dtype).itemsize
    vmem_cap = _tpu_vmem_capacity_bytes()
    tt = _pick_time_tile(B, C, T, itemsize, vmem_cap)
    grid = (B, pl.cdiv(T, tt))

    # Explicit VMEM budget: (2 in + 2 out) double-buffered x blocks + params,
    # with headroom, clamped to the physical per-core capacity.
    block_bytes = C * tt * itemsize
    footprint = 4 * block_bytes + 4 * C * 4
    vmem_limit = int(min(vmem_cap, max(int(1.4 * footprint) + (1 << 20), 8 << 20)))

    # (C, 1) layout so gamma/beta broadcast along the time (lane) axis.
    g2 = gamma.reshape(C, 1)
    b2 = beta.reshape(C, 1)

    kernel = functools.partial(_layer_norm_kernel, float(eps))

    return pl.pallas_call(
        kernel,
        out_shape=jax.ShapeDtypeStruct((B, C, T), x.dtype),
        grid_spec=pltpu.PrefetchScalarGridSpec(
            num_scalar_prefetch=0,
            grid=grid,
            in_specs=[
                # gamma / beta: tiny (C,1) block, same tile for every step.
                pl.BlockSpec((C, 1), lambda b, j: (0, 0)),
                pl.BlockSpec((C, 1), lambda b, j: (0, 0)),
                # x: batch squeezed, full channel extent, time tiled lane-dense.
                pl.BlockSpec((None, C, tt), lambda b, j: (b, 0, j)),
            ],
            out_specs=pl.BlockSpec((None, C, tt), lambda b, j: (b, 0, j)),
        ),
        compiler_params=pltpu.CompilerParams(
            dimension_semantics=("parallel", "parallel"),
            vmem_limit_bytes=vmem_limit,
        ),
    )(g2, b2, x)


class LayerNorm:
    """Mirror of the PyTorch module: per-channel affine LayerNorm on (B, C, T)."""

    def __init__(self, channels, eps=1e-5):
        self.eps = eps
        self.gamma = jnp.ones((channels,), dtype=jnp.float32)
        self.beta = jnp.zeros((channels,), dtype=jnp.float32)

    def __call__(self, x):
        return pallas_channel_layer_norm(x, self.gamma, self.beta, self.eps)


def _layer_norm_ref(x, gamma, beta, eps):
    """Pure-jnp reference mirroring the PyTorch forward exactly."""
    xt = jnp.swapaxes(x, 1, -1).astype(jnp.float32)          # (B, T, C)
    mean = jnp.mean(xt, axis=-1, keepdims=True)
    var = jnp.mean((xt - mean) ** 2, axis=-1, keepdims=True)
    y = (xt - mean) / jnp.sqrt(var + eps) * gamma + beta
    return jnp.swapaxes(y, 1, -1)                            # (B, C, T)


if __name__ == "__main__":
    key = jax.random.PRNGKey(0)
    k_x, k_g, k_b, k_x2 = jax.random.split(key, 4)

    # Small shape consistent with the module: (batch, channels, time_steps).
    B, C, T = 2, 32, 256
    x = jax.random.normal(k_x, (B, C, T), dtype=jnp.float32)

    mod = LayerNorm(channels=C, eps=1e-5)
    # Non-trivial affine params so the gamma/beta path is actually exercised.
    mod.gamma = 1.0 + 0.1 * jax.random.normal(k_g, (C,), dtype=jnp.float32)
    mod.beta = 0.1 * jax.random.normal(k_b, (C,), dtype=jnp.float32)

    # 1) Main aligned f32 case.
    y = jax.block_until_ready(mod(x))
    y_ref = _layer_norm_ref(x, mod.gamma, mod.beta, mod.eps)
    assert y.shape == (B, C, T), y.shape
    assert jnp.allclose(y, y_ref, rtol=1e-5, atol=1e-5), (
        float(jnp.max(jnp.abs(y - y_ref)))
    )

    # 2) Non-128-aligned T exercises the masked tail-tile path.
    T2 = 200
    x2 = jax.random.normal(k_x2, (B, C, T2), dtype=jnp.float32)
    y2 = jax.block_until_ready(mod(x2))
    y2_ref = _layer_norm_ref(x2, mod.gamma, mod.beta, mod.eps)
    assert y2.shape == (B, C, T2), y2.shape
    assert jnp.allclose(y2, y2_ref, rtol=1e-5, atol=1e-5), (
        float(jnp.max(jnp.abs(y2 - y2_ref)))
    )

    # 3) bf16 inputs/outputs (bandwidth-halving path; stats stay in f32).
    xb = x.astype(jnp.bfloat16)
    yb = jax.block_until_ready(mod(xb))
    yb_ref = _layer_norm_ref(xb, mod.gamma, mod.beta, mod.eps).astype(jnp.bfloat16)
    assert yb.dtype == jnp.bfloat16 and yb.shape == (B, C, T)
    assert jnp.allclose(
        yb.astype(jnp.float32), yb_ref.astype(jnp.float32), rtol=2e-2, atol=2e-2
    ), float(jnp.max(jnp.abs(yb.astype(jnp.float32) - yb_ref.astype(jnp.float32))))

    print("KERNEL_OK")
</pallas_src>

<mosaic_0001>
module attributes {stable_mosaic.version = 11 : i64} {
  func.func @_layer_norm_kernel(%arg0: i32, %arg1: i32, %arg2: memref<32x1xf32, #tpu.memory_space<vmem>>, %arg3: memref<32x1xf32, #tpu.memory_space<vmem>>, %arg4: memref<1x32x256xf32, #tpu.memory_space<vmem>>, %arg5: memref<1x32x256xf32, #tpu.memory_space<vmem>>) attributes {dimension_semantics = [#tpu.dimension_semantics<parallel>, #tpu.dimension_semantics<parallel>], iteration_bounds = array<i64: 2, 1>, scalar_prefetch = 0 : i64, scratch_operands = 0 : i64, tpu.core_type = #tpu.core_type<tc>, window_params = [{pipeline_mode = #tpu.pipeline_mode<synchronous>, transform_indices = @transform_0, window_bounds = array<i64: 32, 1>}, {pipeline_mode = #tpu.pipeline_mode<synchronous>, transform_indices = @transform_1, window_bounds = array<i64: 32, 1>}, {transform_indices = @transform_2, window_bounds = array<i64: 1, 32, 256>}, {transform_indices = @transform_3, window_bounds = array<i64: 1, 32, 256>}]} {
    %c0 = arith.constant 0 : index
    %c0_0 = arith.constant 0 : index
    %c0_1 = arith.constant 0 : index
    %0 = vector.load %arg4[%c0, %c0_0, %c0_1] : memref<1x32x256xf32, #tpu.memory_space<vmem>>, vector<1x32x256xf32>
    %1 = vector.shape_cast %0 : vector<1x32x256xf32> to vector<32x256xf32>
    %cst = arith.constant dense<0.000000e+00> : vector<256xf32>
    %2 = vector.multi_reduction <add>, %1, %cst [0] : vector<32x256xf32> to vector<256xf32>
    %3 = vector.shape_cast %2 : vector<256xf32> to vector<1x256xf32>
    %cst_2 = arith.constant 3.200000e+01 : f32
    %4 = vector.broadcast %cst_2 : f32 to vector<1x256xf32>
    %5 = arith.divf %3, %4 : vector<1x256xf32>
    %6 = vector.broadcast %5 : vector<1x256xf32> to vector<32x256xf32>
    %7 = arith.subf %1, %6 : vector<32x256xf32>
    %8 = arith.mulf %7, %7 : vector<32x256xf32>
    %cst_3 = arith.constant dense<0.000000e+00> : vector<256xf32>
    %9 = vector.multi_reduction <add>, %8, %cst_3 [0] : vector<32x256xf32> to vector<256xf32>
    %10 = vector.shape_cast %9 : vector<256xf32> to vector<1x256xf32>
    %cst_4 = arith.constant 3.200000e+01 : f32
    %11 = vector.broadcast %cst_4 : f32 to vector<1x256xf32>
    %12 = arith.divf %10, %11 : vector<1x256xf32>
    %cst_5 = arith.constant 9.99999974E-6 : f32
    %13 = vector.broadcast %cst_5 : f32 to vector<1x256xf32>
    %14 = arith.addf %12, %13 : vector<1x256xf32>
    %15 = math.rsqrt %14 : vector<1x256xf32>
    %c0_6 = arith.constant 0 : index
    %c0_7 = arith.constant 0 : index
    %16 = vector.load %arg2[%c0_6, %c0_7] : memref<32x1xf32, #tpu.memory_space<vmem>>, vector<32x1xf32>
    %c0_8 = arith.constant 0 : index
    %c0_9 = arith.constant 0 : index
    %17 = vector.load %arg3[%c0_8, %c0_9] : memref<32x1xf32, #tpu.memory_space<vmem>>, vector<32x1xf32>
    %18 = vector.broadcast %15 : vector<1x256xf32> to vector<32x256xf32>
    %19 = arith.mulf %7, %18 : vector<32x256xf32>
    %20 = vector.broadcast %16 : vector<32x1xf32> to vector<32x256xf32>
    %21 = arith.mulf %19, %20 : vector<32x256xf32>
    %22 = vector.broadcast %17 : vector<32x1xf32> to vector<32x256xf32>
    %23 = arith.addf %21, %22 : vector<32x256xf32>
    %c0_10 = arith.constant 0 : index
    %c0_11 = arith.constant 0 : index
    %c0_12 = arith.constant 0 : index
    %24 = vector.load %arg5[%c0_10, %c0_11, %c0_12] : memref<1x32x256xf32, #tpu.memory_space<vmem>>, vector<1x32x256xf32>
    %25 = vector.shape_cast %24 : vector<1x32x256xf32> to vector<32x256xf32>
    %26 = vector.shape_cast %23 : vector<32x256xf32> to vector<1x32x256xf32>
    tpu.vector_store %arg5[%c0_10, %c0_11, %c0_12], %26 {strides = array<i32>} : memref<1x32x256xf32, #tpu.memory_space<vmem>>, vector<1x32x256xf32>,
    return
  }
  func.func @transform_0(%arg0: i32, %arg1: i32) -> (i32, i32) {
    %c0_i32 = arith.constant 0 : i32
    %c0_i32_0 = arith.constant 0 : i32
    %c0_i32_1 = arith.constant 0 : i32
    return %c0_i32, %c0_i32_0 : i32, i32
  }
  func.func @transform_1(%arg0: i32, %arg1: i32) -> (i32, i32) {
    %c0_i32 = arith.constant 0 : i32
    %c0_i32_0 = arith.constant 0 : i32
    %c0_i32_1 = arith.constant 0 : i32
    return %c0_i32, %c0_i32_0 : i32, i32
  }
  func.func @transform_2(%arg0: i32, %arg1: i32) -> (i32, i32, i32) {
    %c0_i32 = arith.constant 0 : i32
    %c0_i32_0 = arith.constant 0 : i32
    return %arg0, %c0_i32, %arg1 : i32, i32, i32
  }
  func.func @transform_3(%arg0: i32, %arg1: i32) -> (i32, i32, i32) {
    %c0_i32 = arith.constant 0 : i32
    %c0_i32_0 = arith.constant 0 : i32
    return %arg0, %c0_i32, %arg1 : i32, i32, i32
  }
}

</mosaic_0001>

<llo_original>
// kernel: tpu_custom_call.1
$region0: #{tpu_custom_call.1}
  #allocation0 [shape = 'u32[]', space=smem, size = 0x4, offset = 0x4, fixed_abs, tag = 'smem constant byte address 0x4 - core index']
  #allocation1 [shape = 'u32[144,128]{1,0:T(1,128)}', space=vmem, size = 0x12000, scoped, tag = 'internal scratch']
  %s0 = inlined_call_operand.vmem [shape: f32[32,1], index: 0, kind: input, shape index: {}]
  %s1 = inlined_call_operand.vmem [shape: f32[32,1], index: 1, kind: input, shape index: {}]
  %s2 = inlined_call_operand.hbm [shape: f32[2,32,256], index: 2, kind: input, shape index: {}]
  %s3 = inlined_call_operand.hbm [shape: f32[2,32,256], index: 3, kind: output, shape index: {}]
  %s4 = sld [smem:[#allocation0]]
  $region49: #{tpu_custom_call.1} parent=0
    _
  %s6 = ssub.s32 1, %s4
  %s7 = scalar_select 0, %s6, %s4
  $region1: #{tpu_custom_call.1} parent=0
    #allocation2 [shape = 'u8[65536]{0}', space=vmem, size = 0x10000, scoped, tag = 'input window, operand 2']
    #allocation3 [shape = 's32[2]{0}', space=sflag, size = 0x8, scoped, tag = 'scoped memory for tpu_custom_call.1']
    #allocation4 [shape = 's32[2]{0}', space=sflag, size = 0x8, scoped, tag = 'scoped memory for tpu_custom_call.1']
    #allocation5 [shape = 'u8[65536]{0}', space=vmem, size = 0x10000, scoped, tag = 'output window, operand 0']
    %8 = vsyncpa [#allocation3], 0
    %s9 = scalar_lea.sflag [#allocation3], 1
    %10 = vsyncpa %s9, 0
    %11 = vsyncpa [#allocation4], 0
    %s12 = scalar_lea.sflag [#allocation4], 1
    %13 = vsyncpa %s12, 0
    loop: start=0, step=1, limit=4
    $region2: #{tpu_custom_call.1} parent=1 // loop_pre_header
      _
    $region3: #{tpu_custom_call.1} parent=1 // loop_header
      %s15 = sphi 0, %s19
      %p16 = scmp.ge.s32.totalorder %s15, 4
      %s22 = sphi 0, %s34
      %s23 = sphi 0, %s30
      %s24 = sphi 0, %s22
      %s25 = sphi 0, %s23
      %s26 = sphi 0, %s24
      %s27 = sphi 0, %s25
      %s35 = sphi 0, %s35
      %s37 = sphi 0, %s35
      %s38 = sphi 0, %s37
      %s52 = sphi 0, %s38
      %s56 = sphi 0, %s56
      %s58 = sphi 0, %s56
      %s59 = sphi 0, %s58
      %s73 = sphi 0, %s59
      %s81 = sphi 0, %s83
      %s84 = sphi 0, %s81
      %s85 = sphi 0, %s84
      %s101 = sphi 0, %s85
      %s109 = sphi 0, %s111
      %s112 = sphi 0, %s109
      %s113 = sphi 0, %s112
      %s129 = sphi 0, %s113
    $region4: #{tpu_custom_call.1} parent=1 // loop_header_branch
      %18 = sbr.rel (%p16) target = $region8
    $region5: #{tpu_custom_call.1} parent=1 // loop_body
      %s20 = ssub.s32 %s15, 1
      %s21 = ssub.s32 %s15, 2
      %s28 = sadd.s32 1, %s23
      %p29 = scmp.ge.s32.totalorder %s28, 1
      %s30 = scalar_select %p29, 0, %s28
      %s31 = sadd.s32 1, %s22
      %s32 = scalar_select %p29, %s31, %s22
      %p33 = scmp.ge.s32.totalorder %s32, 2
      %s34 = scalar_select %p33, 0, %s32
      %s36 = sadd.s32 %s35, 1
      %p39 = scmp.eq.s32.totalorder %s15, 1
      %p40 = scmp.ne.s32.totalorder %s35, %s37
      %p41 = scmp.eq.s32.totalorder %s15, 0
      %p42 = por %p40, %p41
      %p43 = scmp.ne.s32.totalorder %s35, %s37
      %p44 = scmp.eq.s32.totalorder %s20, 1
      %p45 = por %p43, %p44
      %p46 = scmp.ne.s32.totalorder %s37, %s38
      %p47 = scmp.eq.s32.totalorder %s20, 0
      %p48 = por %p46, %p47
      %p49 = scmp.ne.s32.totalorder %s37, %s38
      %p50 = scmp.eq.s32.totalorder %s21, 1
      %p51 = por %p49, %p50
      %p53 = scmp.ne.s32.totalorder %s38, %s52
      %p54 = scmp.eq.s32.totalorder %s21, 0
      %p55 = por %p53, %p54
      %s57 = sadd.s32 %s56, 1
      %p60 = scmp.eq.s32.totalorder %s15, 1
      %p61 = scmp.ne.s32.totalorder %s56, %s58
      %p62 = scmp.eq.s32.totalorder %s15, 0
      %p63 = por %p61, %p62
      %p64 = scmp.ne.s32.totalorder %s56, %s58
      %p65 = scmp.eq.s32.totalorder %s20, 1
      %p66 = por %p64, %p65
      %p67 = scmp.ne.s32.totalorder %s58, %s59
      %p68 = scmp.eq.s32.totalorder %s20, 0
      %p69 = por %p67, %p68
      %p70 = scmp.ne.s32.totalorder %s58, %s59
      %p71 = scmp.eq.s32.totalorder %s21, 1
      %p72 = por %p70, %p71
      %p74 = scmp.ne.s32.totalorder %s59, %s73
      %p75 = scmp.eq.s32.totalorder %s21, 0
      %p76 = por %p74, %p75
      %s77 = ssub.s32 %s22, %s34
      %s78 = ssub.s32 %s23, %s30
      %s79 = sor.u32 %s77, %s78
      %p80 = scmp.eq.s32.totalorder %s79, 0
      %s82 = sadd.s32 %s81, 1
      %s83 = scalar_select %p80, %s81, %s82
      %p86 = pneg %p80
      %p87 = scmp.eq.s32.totalorder %s15, 1
      %p88 = por %p86, %p87
      %p89 = scmp.ne.s32.totalorder %s81, %s84
      %p90 = scmp.eq.s32.totalorder %s15, 0
      %p91 = por %p89, %p90
      %p92 = scmp.ne.s32.totalorder %s81, %s84
      %p93 = scmp.eq.s32.totalorder %s20, 1
      %p94 = por %p92, %p93
      %p95 = scmp.ne.s32.totalorder %s84, %s85
      %p96 = scmp.eq.s32.totalorder %s20, 0
      %p97 = por %p95, %p96
      %p98 = scmp.ne.s32.totalorder %s84, %s85
      %p99 = scmp.eq.s32.totalorder %s21, 1
      %p100 = por %p98, %p99
      %p102 = scmp.ne.s32.totalorder %s85, %s101
      %p103 = scmp.eq.s32.totalorder %s21, 0
      %p104 = por %p102, %p103
      %s105 = ssub.s32 %s22, %s34
      %s106 = ssub.s32 %s23, %s30
      %s107 = sor.u32 %s105, %s106
      %p108 = scmp.eq.s32.totalorder %s107, 0
      %s110 = sadd.s32 %s109, 1
      %s111 = scalar_select %p108, %s109, %s110
      %p114 = pneg %p108
      %p115 = scmp.eq.s32.totalorder %s15, 1
      %p116 = por %p114, %p115
      %p117 = scmp.ne.s32.totalorder %s109, %s112
      %p118 = scmp.eq.s32.totalorder %s15, 0
      %p119 = por %p117, %p118
      %p120 = scmp.ne.s32.totalorder %s109, %s112
      %p121 = scmp.eq.s32.totalorder %s20, 1
      %p122 = por %p120, %p121
      %p123 = scmp.ne.s32.totalorder %s112, %s113
      %p124 = scmp.eq.s32.totalorder %s20, 0
      %p125 = por %p123, %p124
      %p126 = scmp.ne.s32.totalorder %s112, %s113
      %p127 = scmp.eq.s32.totalorder %s21, 1
      %p128 = por %p126, %p127
      %p130 = scmp.ne.s32.totalorder %s113, %s129
      %p131 = scmp.eq.s32.totalorder %s21, 0
      %p132 = por %p130, %p131
      %p133 = scmp.le.s32.totalorder 1, %s15
      %p134 = scmp.lt.s32.totalorder %s15, 3
      %p135 = pnand %p133, %p134
      %p136 = pneg %p135
      // Predicated region
      $region9: #{tpu_custom_call.1} parent=5 // pred_check
        _
      $region10: #{tpu_custom_call.1} parent=5 // pred_check_branch
        %138 = sbr.rel (%p135) target = $region12
      $region11: #{tpu_custom_call.1} parent=5 // pred_region
        %s139 = ssub.s32 %s15, 1
        // Predicated region
        $region13: #{tpu_custom_call.1} parent=11 // pred_check
          %p140 = pneg %p48
        $region14: #{tpu_custom_call.1} parent=11 // pred_check_branch
          %142 = sbr.rel (%p140) target = $region16
        $region15: #{tpu_custom_call.1} parent=11 // pred_region
          _
        $region16: #{tpu_custom_call.1} parent=11 // pred_fallthru
          _
        // Predicated region
        $region17: #{tpu_custom_call.1} parent=11 // pred_check
          %p143 = pneg %p69
        $region18: #{tpu_custom_call.1} parent=11 // pred_check_branch
          %145 = sbr.rel (%p143) target = $region20
        $region19: #{tpu_custom_call.1} parent=11 // pred_region
          _
        $region20: #{tpu_custom_call.1} parent=11 // pred_fallthru
          _
      $region12: #{tpu_custom_call.1} parent=5 // pred_fallthru
        _
      %p146 = scmp.lt.s32.totalorder %s15, 2
      // Predicated region
      $region21: #{tpu_custom_call.1} parent=5 // pred_check
        %p147 = pneg %p146
      $region22: #{tpu_custom_call.1} parent=5 // pred_check_branch
        %149 = sbr.rel (%p147) target = $region24
      $region23: #{tpu_custom_call.1} parent=5 // pred_region
        // Predicated region
        $region25: #{tpu_custom_call.1} parent=23 // pred_check
          %p150 = pneg %p91
        $region26: #{tpu_custom_call.1} parent=23 // pred_check_branch
          %152 = sbr.rel (%p150) target = $region28
        $region27: #{tpu_custom_call.1} parent=23 // pred_region
          %s153 = sand.u32 %s81, 1
          %s154 = scalar_lea.sflag [#allocation3], %s153
          %s155 = sand.u32 %s81, 1
          %s156 = smul.addr %s155, 64
          %s157 = scalar_lea.vmem [#allocation2], %s156
          %s158 = smul.u32 2, %s23
          %s160 = ssub.s32 1024, 1024
          %161 = vsyncadd %s154, %s160
          %s162 = smul.addr %s22, 8
          %s163 = sadd.s32 %s158, %s162
          %s164 = smul.addr %s163, 128
          %s165 = scalar_lea.hbm %s2, %s164
          %s166 = sshll.u32 %s157, 4
          %s167 = int_to_ptr.vmem [resolvable:$true] %s166
          %172 = dma.hbm_to_vmem [thread:$0]  %s165, 1024, %s167, %s154, 256, 256, 16
        $region28: #{tpu_custom_call.1} parent=23 // pred_fallthru
          _
      $region24: #{tpu_custom_call.1} parent=5 // pred_fallthru
        _
      %p173 = scmp.le.s32.totalorder 1, %s15
      %p174 = scmp.lt.s32.totalorder %s15, 3
      %p175 = pnand %p173, %p174
      %p176 = pneg %p175
      // Predicated region
      $region29: #{tpu_custom_call.1} parent=5 // pred_check
        _
      $region30: #{tpu_custom_call.1} parent=5 // pred_check_branch
        %178 = sbr.rel (%p175) target = $region32
      $region31: #{tpu_custom_call.1} parent=5 // pred_region
        %s179 = ssub.s32 %s15, 1
        %s180 = sand.u32 %s84, 1
        %s181 = scalar_lea.sflag [#allocation3], %s180
        %s182 = sand.u32 %s84, 1
        %s183 = smul.addr %s182, 64
        %s184 = scalar_lea.vmem [#allocation2], %s183
        // Predicated region
        $region33: #{tpu_custom_call.1} parent=31 // pred_check
          %p185 = pneg %p97
        $region34: #{tpu_custom_call.1} parent=31 // pred_check_branch
          %187 = sbr.rel (%p185) target = $region36
        $region35: #{tpu_custom_call.1} parent=31 // pred_region
          %188 = dma.done %s181, 1024
        $region36: #{tpu_custom_call.1} parent=31 // pred_fallthru
          _
        %p189 = pneg %p48
        %p190 = pneg %p45
        %p191 = pneg %p69
        %p192 = pneg %p66
        %s193 = sand.u32 %s84, 1
        %s194 = scalar_lea.sflag [#allocation3], %s193
        %s195 = sand.u32 %s84, 1
        %s196 = smul.addr %s195, 64
        %s197 = scalar_lea.vmem [#allocation2], %s196
        %p198 = pneg %p97
        %p199 = pneg %p94
        %p200 = pneg %p125
        %p201 = pneg %p122
        %s202 = sand.u32 %s112, 1
        %s203 = scalar_lea.sflag [#allocation4], %s202
        %s204 = sand.u32 %s112, 1
        %s205 = smul.addr %s204, 64
        %s206 = scalar_lea.vmem [#allocation5], %s205
        %s207 = smul.u32 2, %s25
        %s208 = smul.u32 2, %s25
        %v209 = vld [vmem:[%s184] sm:$0xff]
        %v210 = vld [vmem:[%s184 + $0x8] sm:$0xff]
        %v211 = vld [vmem:[%s184 + $0x10] sm:$0xff]
        %v212 = vld [vmem:[%s184 + $0x18] sm:$0xff]
        %v213 = vld [vmem:[%s184 + $0x20] sm:$0xff]
        %v214 = vld [vmem:[%s184 + $0x28] sm:$0xff]
        %v215 = vld [vmem:[%s184 + $0x30] sm:$0xff]
        %v216 = vld [vmem:[%s184 + $0x38] sm:$0xff]
        %v217 = vadd.f32 %v209, %v211
        %v218 = vadd.f32 %v217, %v213
        %v219 = vadd.f32 %v218, %v215
        %v220 = vrot.slane %v219, 4
        %v221 = vadd.f32 %v219, %v220
        %v222 = vrot.slane %v221, 2
        %v223 = vadd.f32 %v221, %v222
        %v224 = vrot.slane %v223, 1
        %v225 = vadd.f32 %v223, %v224
        %v226 = vadd.f32 %v210, %v212
        %v227 = vadd.f32 %v226, %v214
        %v228 = vadd.f32 %v227, %v216
        %v229 = vrot.slane %v228, 4
        %v230 = vadd.f32 %v228, %v229
        %v231 = vrot.slane %v230, 2
        %v232 = vadd.f32 %v230, %v231
        %v233 = vrot.slane %v232, 1
        %v234 = vadd.f32 %v232, %v233
        %v235 = vrcp.pop 32.0
        %v236 = vmul.f32 %v225, %v235
        %v237 = vmul.f32 %v234, %v235
        %v238 = vsub.f32 %v209, %v236
        %v239 = vsub.f32 %v210, %v237
        %v240 = vsub.f32 %v211, %v236
        %v241 = vsub.f32 %v212, %v237
        %v242 = vsub.f32 %v213, %v236
        %v243 = vsub.f32 %v214, %v237
        %v244 = vsub.f32 %v215, %v236
        %v245 = vsub.f32 %v216, %v237
        %v246 = vmul.f32 %v238, %v238
        %v247 = vmul.f32 %v239, %v239
        %v248 = vmul.f32 %v240, %v240
        %v249 = vmul.f32 %v241, %v241
        %v250 = vmul.f32 %v242, %v242
        %v251 = vmul.f32 %v243, %v243
        %v252 = vmul.f32 %v244, %v244
        %v253 = vmul.f32 %v245, %v245
        %v254 = vadd.f32 %v246, %v248
        %v255 = vadd.f32 %v254, %v250
        %v256 = vadd.f32 %v255, %v252
        %v257 = vrot.slane %v256, 4
        %v258 = vadd.f32 %v256, %v257
        %v259 = vrot.slane %v258, 2
        %v260 = vadd.f32 %v258, %v259
        %v261 = vrot.slane %v260, 1
        %v262 = vadd.f32 %v260, %v261
        %v263 = vadd.f32 %v247, %v249
        %v264 = vadd.f32 %v263, %v251
        %v265 = vadd.f32 %v264, %v253
        %v266 = vrot.slane %v265, 4
        %v267 = vadd.f32 %v265, %v266
        %v268 = vrot.slane %v267, 2
        %v269 = vadd.f32 %v267, %v268
        %v270 = vrot.slane %v269, 1
        %v271 = vadd.f32 %v269, %v270
        %v272 = vmul.f32 %v262, %v235
        %v273 = vmul.f32 %v271, %v235
        %v274 = vadd.f32 %v272, 1e-05
        %v275 = vadd.f32 %v273, 1e-05
        %v276 = vrsqrt.pop %v274
        %v277 = vrsqrt.pop %v275
        %v278 = vld [vmem:[%s0] sm:$0xff]
        %v279 = vld [vmem:[%s0 + $0x8] sm:$0xff]
        %v280 = vld [vmem:[%s0 + $0x10] sm:$0xff]
        %v281 = vld [vmem:[%s0 + $0x18] sm:$0xff]
        %v282 = vld [vmem:[%s1] sm:$0xff]
        %v283 = vld [vmem:[%s1 + $0x8] sm:$0xff]
        %v284 = vld [vmem:[%s1 + $0x10] sm:$0xff]
        %v285 = vld [vmem:[%s1 + $0x18] sm:$0xff]
        %v286 = vmul.f32 %v238, %v276
        %v287 = vmul.f32 %v239, %v277
        %v288 = vmul.f32 %v240, %v276
        %v289 = vmul.f32 %v241, %v277
        %v290 = vmul.f32 %v242, %v276
        %v291 = vmul.f32 %v243, %v277
        %v292 = vmul.f32 %v244, %v276
        %v293 = vmul.f32 %v245, %v277
        %295 = vset.pattern.permute.xlu0 0
        %296 = vperm.xlu0 %295, %v278
        %v297 = vpop.permute.xlu0 %296
        %300 = vset.pattern.permute.xlu0 0
        %301 = vperm.xlu0 %300, %v279
        %v302 = vpop.permute.xlu0 %301
        %305 = vset.pattern.permute.xlu0 0
        %306 = vperm.xlu0 %305, %v280
        %v307 = vpop.permute.xlu0 %306
        %310 = vset.pattern.permute.xlu0 0
        %311 = vperm.xlu0 %310, %v281
        %v312 = vpop.permute.xlu0 %311
        %v314 = vmul.f32 %v286, %v297
        %v315 = vmul.f32 %v287, %v297
        %v316 = vmul.f32 %v288, %v302
        %v317 = vmul.f32 %v289, %v302
        %v318 = vmul.f32 %v290, %v307
        %v319 = vmul.f32 %v291, %v307
        %v320 = vmul.f32 %v292, %v312
        %v321 = vmul.f32 %v293, %v312
        %323 = vset.pattern.permute.xlu0 0
        %324 = vperm.xlu0 %323, %v282
        %v325 = vpop.permute.xlu0 %324
        %328 = vset.pattern.permute.xlu0 0
        %329 = vperm.xlu0 %328, %v283
        %v330 = vpop.permute.xlu0 %329
        %333 = vset.pattern.permute.xlu0 0
        %334 = vperm.xlu0 %333, %v284
        %v335 = vpop.permute.xlu0 %334
        %338 = vset.pattern.permute.xlu0 0
        %339 = vperm.xlu0 %338, %v285
        %v340 = vpop.permute.xlu0 %339
        %v342 = vadd.f32 %v314, %v325
        %v343 = vadd.f32 %v315, %v325
        %v344 = vadd.f32 %v316, %v330
        %v345 = vadd.f32 %v317, %v330
        %v346 = vadd.f32 %v318, %v335
        %v347 = vadd.f32 %v319, %v335
        %v348 = vadd.f32 %v320, %v340
        %v349 = vadd.f32 %v321, %v340
        %350 = vst [vmem:[%s206] sm:$0xff] %v342
        %351 = vst [vmem:[%s206 + $0x8] sm:$0xff] %v343
        %352 = vst [vmem:[%s206 + $0x10] sm:$0xff] %v344
        %353 = vst [vmem:[%s206 + $0x18] sm:$0xff] %v345
        %354 = vst [vmem:[%s206 + $0x20] sm:$0xff] %v346
        %355 = vst [vmem:[%s206 + $0x28] sm:$0xff] %v347
        %356 = vst [vmem:[%s206 + $0x30] sm:$0xff] %v348
        %357 = vst [vmem:[%s206 + $0x38] sm:$0xff] %v349
        %s358 = sand.u32 %s112, 1
        %s359 = scalar_lea.sflag [#allocation4], %s358
        %s360 = sand.u32 %s112, 1
        %s361 = smul.addr %s360, 64
        %s362 = scalar_lea.vmem [#allocation5], %s361
        // Predicated region
        $region37: #{tpu_custom_call.1} parent=31 // pred_check
          %p363 = pneg %p122
        $region38: #{tpu_custom_call.1} parent=31 // pred_check_branch
          %365 = sbr.rel (%p363) target = $region40
        $region39: #{tpu_custom_call.1} parent=31 // pred_region
          %s366 = smul.u32 2, %s25
          %s368 = ssub.s32 1024, 1024
          %369 = vsyncadd %s359, %s368
          %s370 = smul.addr %s24, 8
          %s371 = sadd.s32 %s366, %s370
          %s372 = smul.addr %s371, 128
          %s373 = scalar_lea.hbm %s3, %s372
          %s374 = sshll.u32 %s362, 4
          %s375 = int_to_ptr.vmem [resolvable:$true] %s374
          %380 = dma.vmem_to_hbm [thread:$0]  %s375, 1024, %s373, %s359, 256, 256, 16
        $region40: #{tpu_custom_call.1} parent=31 // pred_fallthru
          _
      $region32: #{tpu_custom_call.1} parent=5 // pred_fallthru
        _
      %p381 = scmp.le.s32.totalorder 2, %s15
      // Predicated region
      $region41: #{tpu_custom_call.1} parent=5 // pred_check
        %p382 = pneg %p381
      $region42: #{tpu_custom_call.1} parent=5 // pred_check_branch
        %384 = sbr.rel (%p382) target = $region44
      $region43: #{tpu_custom_call.1} parent=5 // pred_region
        %s385 = ssub.s32 %s15, 2
        // Predicated region
        $region45: #{tpu_custom_call.1} parent=43 // pred_check
          %p386 = pneg %p128
        $region46: #{tpu_custom_call.1} parent=43 // pred_check_branch
          %388 = sbr.rel (%p386) target = $region48
        $region47: #{tpu_custom_call.1} parent=43 // pred_region
          %s389 = sand.u32 %s113, 1
          %s390 = scalar_lea.sflag [#allocation4], %s389
          %s391 = sand.u32 %s113, 1
          %s392 = smul.addr %s391, 64
          %s393 = scalar_lea.vmem [#allocation5], %s392
          %394 = dma.done %s390, 1024
        $region48: #{tpu_custom_call.1} parent=43 // pred_fallthru
          _
      $region44: #{tpu_custom_call.1} parent=5 // pred_fallthru
        _
    $region6: #{tpu_custom_call.1} parent=1 // loop_footer
      %s19 = sadd.s32 1, %s15
    $region7: #{tpu_custom_call.1} parent=1 // loop_footer_branch
      %14 = sbr.rel target = $region3
    $region8: #{tpu_custom_call.1} parent=1 // loop_exit
      _
    %395 = vsyncpa [#allocation3], 1
    %s396 = scalar_lea.sflag [#allocation3], 1
    %397 = vsyncpa %s396, 1
    %398 = vsyncpa [#allocation4], 1
    %s399 = scalar_lea.sflag [#allocation4], 1
    %400 = vsyncpa %s399, 1

</llo_original>
